<compile_context>
chip_gen: v5e
topology: v5e:2x2
jax: 0.10.0
libtpu: 0.0.40
codegen_flags: <defaults>
</compile_context>

<pallas_src>
import jax
import jax.numpy as jnp
from jax.experimental import pallas as pl
from jax.experimental.pallas import tpu as pltpu

LANE = 128          # TPU lane width (batch tile granularity in this layout)
SUBLANE = 8         # sublane group (out_dim padding granularity)
# Per-step batch tile.  At 4096 the per-step footprint (double-buffered z^T /
# out^T blocks + resident weights + the (128, blk) f32 hidden intermediate) is
# ~5 MiB, comfortably inside the default scoped-VMEM limit on every
# generation (16 MiB v5e, 32 MiB v6e/v7x; v7x physical VMEM is only 64 MiB
# shared by 2 TCs, so stay modest).
MAX_BLOCK_BATCH = 4096


def generator_kernel(zT_ref, w1T_ref, b1_ref, w2T_ref, b2_ref, o_ref):
    # Feature-major layout: batch is the lane axis, features are sublanes.
    #
    # FC1 (K = noise_dim, tiny): VPU outer-product FMAs, not the MXU.
    #   h[n, m] = relu( sum_k w1[k, n] * z[m, k] + b1[n] )
    zT = zT_ref[...]                                  # (noise_dim, blk)
    w1T = w1T_ref[...]                                # (hidden_pad, noise_dim)
    blk = zT.shape[1]
    acc = jnp.broadcast_to(b1_ref[...], (w1T.shape[0], blk)).astype(jnp.float32)
    for k in range(zT.shape[0]):                      # static unroll, noise_dim == 2
        acc = acc + w1T[:, k:k + 1] * zT[k:k + 1, :]  # (hidden_pad,1)*(1,blk)
    h = jnp.maximum(acc, 0.0)                         # ReLU on the VPU

    # FC2 on the MXU: (out_pad8, hidden_pad) @ (hidden_pad, blk), f32 accumulate.
    out = jnp.dot(w2T_ref[...], h, preferred_element_type=jnp.float32)
    # Bias folded into the (lane-dense, unmasked) store.
    o_ref[...] = (out + b2_ref[...]).astype(o_ref.dtype)


def generator_forward(z, w1, b1, w2, b2, *, block_batch=None):
    """Pallas forward of relu(z @ w1 + b1) @ w2 + b2.

    z: (B, noise_dim); w1: (noise_dim, hidden); b1: (hidden,) or (1, hidden);
    w2: (hidden, out_dim); b2: (out_dim,) or (1, out_dim).
    Returns (B, out_dim) float32 — one sample per row, like the nn.Module.
    """
    B, noise_dim = z.shape
    hidden = w1.shape[1]
    out_dim = w2.shape[1]
    hidden_pad = max(LANE, pl.cdiv(hidden, LANE) * LANE)
    out_pad = max(SUBLANE, pl.cdiv(out_dim, SUBLANE) * SUBLANE)

    # Transposed + zero-padded parameters (correctness-preserving:
    # padded b1 rows are 0 -> relu(0) = 0; padded w2^T columns are 0;
    # padded output rows are 0 @ h + 0 = 0 and sliced off in the wrapper).
    w1T = jnp.zeros((hidden_pad, noise_dim), jnp.float32).at[:hidden, :].set(
        jnp.asarray(w1, jnp.float32).T)
    b1c = jnp.zeros((hidden_pad, 1), jnp.float32).at[:hidden, :].set(
        jnp.asarray(b1, jnp.float32).reshape(hidden, 1))
    w2T = jnp.zeros((out_pad, hidden_pad), jnp.float32).at[:out_dim, :hidden].set(
        jnp.asarray(w2, jnp.float32).T)
    b2c = jnp.zeros((out_pad, 1), jnp.float32).at[:out_dim, :].set(
        jnp.asarray(b2, jnp.float32).reshape(out_dim, 1))

    # Batch tile: lane axis of the transposed layout -> multiple of 128.
    # Aim for >= 2 grid steps when the batch allows it so v7x's two
    # TensorCores both receive work from the "parallel" grid axis.
    if block_batch is None:
        per_core = pl.cdiv(pl.cdiv(B, 2), LANE) * LANE
        block_batch = max(LANE, min(MAX_BLOCK_BATCH, per_core))
    else:
        block_batch = max(LANE, min(MAX_BLOCK_BATCH,
                                    pl.cdiv(block_batch, LANE) * LANE))
    Bp = pl.cdiv(B, block_batch) * block_batch

    # Feature-major z: (noise_dim, B).  Only the (small) tail is padded.
    zT = jnp.asarray(z, jnp.float32).T
    if Bp != B:
        zT = jnp.pad(zT, ((0, 0), (0, Bp - B)))

    outT = pl.pallas_call(
        generator_kernel,
        out_shape=jax.ShapeDtypeStruct((out_pad, Bp), jnp.float32),
        grid=(Bp // block_batch,),
        in_specs=[
            # z^T tiles along the batch (lane) axis.
            pl.BlockSpec((noise_dim, block_batch), lambda i: (0, i)),
            # Weights / biases: constant index_map -> VMEM-resident.
            pl.BlockSpec((hidden_pad, noise_dim), lambda i: (0, 0)),
            pl.BlockSpec((hidden_pad, 1), lambda i: (0, 0)),
            pl.BlockSpec((out_pad, hidden_pad), lambda i: (0, 0)),
            pl.BlockSpec((out_pad, 1), lambda i: (0, 0)),
        ],
        out_specs=pl.BlockSpec((out_pad, block_batch), lambda i: (0, i)),
        compiler_params=pltpu.CompilerParams(
            dimension_semantics=("parallel",)),  # shards batch across v7x TCs
    )(zT, w1T, b1c, w2T, b2c)

    # Back to the module's (B, out_dim) row-major convention; padded output
    # rows / padded batch columns are dropped (tiny layout plumbing only).
    return outT[:out_dim, :B].T


def init_params(key, noise_dim=2, output_dim=2, hidden_dim=100):
    """Deterministic init mimicking PyTorch's nn.Linear default
    (uniform in +/-1/sqrt(fan_in)). Weights stored as (in, out)."""
    k1, k2, k3, k4 = jax.random.split(key, 4)
    bound1 = 1.0 / jnp.sqrt(noise_dim)
    bound2 = 1.0 / jnp.sqrt(hidden_dim)
    w1 = jax.random.uniform(k1, (noise_dim, hidden_dim), jnp.float32,
                            -bound1, bound1)
    b1 = jax.random.uniform(k2, (1, hidden_dim), jnp.float32, -bound1, bound1)
    w2 = jax.random.uniform(k3, (hidden_dim, output_dim), jnp.float32,
                            -bound2, bound2)
    b2 = jax.random.uniform(k4, (1, output_dim), jnp.float32, -bound2, bound2)
    return w1, b1, w2, b2


if __name__ == "__main__":
    noise_dim, output_dim, hidden_dim = 2, 2, 100

    key = jax.random.PRNGKey(0)
    kz, kz2, kp = jax.random.split(key, 3)
    w1, b1, w2, b2 = init_params(kp, noise_dim, output_dim, hidden_dim)

    def ref_fwd(zz):
        return jnp.maximum(zz @ w1 + b1, 0.0) @ w2 + b2

    # Small single-tile case.
    batch = 8
    z = jax.random.normal(kz, (batch, noise_dim), jnp.float32)
    out = jax.block_until_ready(generator_forward(z, w1, b1, w2, b2))
    assert out.shape == (batch, output_dim)
    assert jnp.allclose(out, ref_fwd(z), atol=1e-5, rtol=1e-5)

    # Multi-step grid + ragged-tail case (exercises batch padding and the
    # 2-step "parallel" grid).
    batch2 = 300
    z2 = jax.random.normal(kz2, (batch2, noise_dim), jnp.float32)
    out2 = jax.block_until_ready(generator_forward(z2, w1, b1, w2, b2))
    assert out2.shape == (batch2, output_dim)
    assert jnp.allclose(out2, ref_fwd(z2), atol=1e-5, rtol=1e-5)

    print("KERNEL_OK")
</pallas_src>

<mosaic_0001>
module attributes {stable_mosaic.version = 11 : i64} {
  func.func @generator_kernel(%arg0: i32, %arg1: memref<2x128xf32, #tpu.memory_space<vmem>>, %arg2: memref<128x2xf32, #tpu.memory_space<vmem>>, %arg3: memref<128x1xf32, #tpu.memory_space<vmem>>, %arg4: memref<8x128xf32, #tpu.memory_space<vmem>>, %arg5: memref<8x1xf32, #tpu.memory_space<vmem>>, %arg6: memref<8x128xf32, #tpu.memory_space<vmem>>) attributes {dimension_semantics = [#tpu.dimension_semantics<parallel>], iteration_bounds = array<i64: 1>, scalar_prefetch = 0 : i64, scratch_operands = 0 : i64, tpu.core_type = #tpu.core_type<tc>, window_params = [{transform_indices = @transform_0, window_bounds = array<i64: 2, 128>}, {pipeline_mode = #tpu.pipeline_mode<synchronous>, transform_indices = @transform_1, window_bounds = array<i64: 128, 2>}, {pipeline_mode = #tpu.pipeline_mode<synchronous>, transform_indices = @transform_2, window_bounds = array<i64: 128, 1>}, {pipeline_mode = #tpu.pipeline_mode<synchronous>, transform_indices = @transform_3, window_bounds = array<i64: 8, 128>}, {pipeline_mode = #tpu.pipeline_mode<synchronous>, transform_indices = @transform_4, window_bounds = array<i64: 8, 1>}, {transform_indices = @transform_5, window_bounds = array<i64: 8, 128>}]} {
    %c0 = arith.constant 0 : index
    %c0_0 = arith.constant 0 : index
    %0 = vector.load %arg1[%c0, %c0_0] : memref<2x128xf32, #tpu.memory_space<vmem>>, vector<2x128xf32>
    %c0_1 = arith.constant 0 : index
    %c0_2 = arith.constant 0 : index
    %1 = vector.load %arg2[%c0_1, %c0_2] : memref<128x2xf32, #tpu.memory_space<vmem>>, vector<128x2xf32>
    %c0_3 = arith.constant 0 : index
    %c0_4 = arith.constant 0 : index
    %2 = vector.load %arg3[%c0_3, %c0_4] : memref<128x1xf32, #tpu.memory_space<vmem>>, vector<128x1xf32>
    %3 = vector.shape_cast %2 : vector<128x1xf32> to vector<128x1xf32>
    %4 = vector.broadcast %3 : vector<128x1xf32> to vector<128x128xf32>
    %5 = vector.extract_strided_slice %1 {offsets = [0, 0], sizes = [128, 1], strides = [1, 1]} : vector<128x2xf32> to vector<128x1xf32>
    %6 = vector.extract_strided_slice %0 {offsets = [0, 0], sizes = [1, 128], strides = [1, 1]} : vector<2x128xf32> to vector<1x128xf32>
    %7 = vector.broadcast %5 : vector<128x1xf32> to vector<128x128xf32>
    %8 = vector.broadcast %6 : vector<1x128xf32> to vector<128x128xf32>
    %9 = arith.mulf %7, %8 : vector<128x128xf32>
    %10 = arith.addf %4, %9 : vector<128x128xf32>
    %11 = vector.extract_strided_slice %1 {offsets = [0, 1], sizes = [128, 1], strides = [1, 1]} : vector<128x2xf32> to vector<128x1xf32>
    %12 = vector.extract_strided_slice %0 {offsets = [1, 0], sizes = [1, 128], strides = [1, 1]} : vector<2x128xf32> to vector<1x128xf32>
    %13 = vector.broadcast %11 : vector<128x1xf32> to vector<128x128xf32>
    %14 = vector.broadcast %12 : vector<1x128xf32> to vector<128x128xf32>
    %15 = arith.mulf %13, %14 : vector<128x128xf32>
    %16 = arith.addf %10, %15 : vector<128x128xf32>
    %cst = arith.constant 0.000000e+00 : f32
    %17 = vector.broadcast %cst : f32 to vector<128x128xf32>
    %18 = arith.maximumf %16, %17 : vector<128x128xf32>
    %c0_5 = arith.constant 0 : index
    %c0_6 = arith.constant 0 : index
    %19 = vector.load %arg4[%c0_5, %c0_6] : memref<8x128xf32, #tpu.memory_space<vmem>>, vector<8x128xf32>
    %cst_7 = arith.constant dense<0.000000e+00> : vector<8x128xf32>
    %20 = tpu.matmul %19, %18, %cst_7 {dimension_numbers = #tpu.dot_dimension_numbers<[1], [0], [0], [1], [0, 0, 1, 1], [], []>} : vector<8x128xf32>, vector<128x128xf32>, vector<8x128xf32> -> vector<8x128xf32>
    %c0_8 = arith.constant 0 : index
    %c0_9 = arith.constant 0 : index
    %21 = vector.load %arg5[%c0_8, %c0_9] : memref<8x1xf32, #tpu.memory_space<vmem>>, vector<8x1xf32>
    %22 = vector.broadcast %21 : vector<8x1xf32> to vector<8x128xf32>
    %23 = arith.addf %20, %22 : vector<8x128xf32>
    %c0_10 = arith.constant 0 : index
    %c0_11 = arith.constant 0 : index
    %24 = vector.load %arg6[%c0_10, %c0_11] : memref<8x128xf32, #tpu.memory_space<vmem>>, vector<8x128xf32>
    tpu.vector_store %arg6[%c0_10, %c0_11], %23 {strides = array<i32>} : memref<8x128xf32, #tpu.memory_space<vmem>>, vector<8x128xf32>,
    return
  }
  func.func @transform_0(%arg0: i32) -> (i32, i32) {
    %c0_i32 = arith.constant 0 : i32
    %c0_i32_0 = arith.constant 0 : i32
    return %c0_i32, %arg0 : i32, i32
  }
  func.func @transform_1(%arg0: i32) -> (i32, i32) {
    %c0_i32 = arith.constant 0 : i32
    %c0_i32_0 = arith.constant 0 : i32
    %c0_i32_1 = arith.constant 0 : i32
    return %c0_i32, %c0_i32_0 : i32, i32
  }
  func.func @transform_2(%arg0: i32) -> (i32, i32) {
    %c0_i32 = arith.constant 0 : i32
    %c0_i32_0 = arith.constant 0 : i32
    %c0_i32_1 = arith.constant 0 : i32
    return %c0_i32, %c0_i32_0 : i32, i32
  }
  func.func @transform_3(%arg0: i32) -> (i32, i32) {
    %c0_i32 = arith.constant 0 : i32
    %c0_i32_0 = arith.constant 0 : i32
    %c0_i32_1 = arith.constant 0 : i32
    return %c0_i32, %c0_i32_0 : i32, i32
  }
  func.func @transform_4(%arg0: i32) -> (i32, i32) {
    %c0_i32 = arith.constant 0 : i32
    %c0_i32_0 = arith.constant 0 : i32
    %c0_i32_1 = arith.constant 0 : i32
    return %c0_i32, %c0_i32_0 : i32, i32
  }
  func.func @transform_5(%arg0: i32) -> (i32, i32) {
    %c0_i32 = arith.constant 0 : i32
    %c0_i32_0 = arith.constant 0 : i32
    return %c0_i32, %arg0 : i32, i32
  }
}

</mosaic_0001>

<llo_original>
// kernel: tpu_custom_call.1
$region0: #{tpu_custom_call.1}
  #allocation0 [shape = 'u32[]', space=smem, size = 0x4, offset = 0x4, fixed_abs, tag = 'smem constant byte address 0x4 - core index']
  #allocation1 [shape = 'u32[72,128]{1,0:T(1,128)}', space=vmem, size = 0x9000, scoped, tag = 'internal scratch']
  %s0 = inlined_call_operand.vmem [shape: f32[2,128], index: 0, kind: input, shape index: {}]
  %s1 = inlined_call_operand.vmem [shape: f32[128,2], index: 1, kind: input, shape index: {}]
  %s2 = inlined_call_operand.vmem [shape: f32[128,1], index: 2, kind: input, shape index: {}]
  %s3 = inlined_call_operand.vmem [shape: f32[8,128], index: 3, kind: input, shape index: {}]
  %s4 = inlined_call_operand.vmem [shape: f32[8,1], index: 4, kind: input, shape index: {}]
  %s5 = inlined_call_operand.hbm [shape: f32[8,128], index: 5, kind: output, shape index: {}]
  %s6 = sld [smem:[#allocation0]]
  $region30: #{tpu_custom_call.1} parent=0
    _
  %s8 = ssub.s32 1, %s6
  %s9 = scalar_select 0, %s8, %s6
  $region1: #{tpu_custom_call.1} parent=0
    #allocation2 [shape = 'u8[4096]{0}', space=vmem, size = 0x1000, scoped, tag = 'output window, operand 0, single buffered']
    #allocation3 [shape = 's32[1]{0}', space=sflag, size = 0x4, scoped, tag = 'scoped memory for tpu_custom_call.1']
    %10 = vsyncpa [#allocation3], 0
    // Predicated region
    $region2: #{tpu_custom_call.1} parent=1 // pred_check
      _
    $region3: #{tpu_custom_call.1} parent=1 // pred_check_branch
      %12 = sbr.rel (0) target = $region5
    $region4: #{tpu_custom_call.1} parent=1 // pred_region
      _
    $region5: #{tpu_custom_call.1} parent=1 // pred_fallthru
      _
    // Predicated region
    $region6: #{tpu_custom_call.1} parent=1 // pred_check
      _
    $region7: #{tpu_custom_call.1} parent=1 // pred_check_branch
      %14 = sbr.rel (0) target = $region9
    $region8: #{tpu_custom_call.1} parent=1 // pred_region
      _
    $region9: #{tpu_custom_call.1} parent=1 // pred_fallthru
      _
    // Predicated region
    $region10: #{tpu_custom_call.1} parent=1 // pred_check
      _
    $region11: #{tpu_custom_call.1} parent=1 // pred_check_branch
      %16 = sbr.rel (0) target = $region13
    $region12: #{tpu_custom_call.1} parent=1 // pred_region
      _
    $region13: #{tpu_custom_call.1} parent=1 // pred_fallthru
      _
    // Predicated region
    $region14: #{tpu_custom_call.1} parent=1 // pred_check
      _
    $region15: #{tpu_custom_call.1} parent=1 // pred_check_branch
      %18 = sbr.rel (0) target = $region17
    $region16: #{tpu_custom_call.1} parent=1 // pred_region
      _
    $region17: #{tpu_custom_call.1} parent=1 // pred_fallthru
      _
    // Predicated region
    $region18: #{tpu_custom_call.1} parent=1 // pred_check
      _
    $region19: #{tpu_custom_call.1} parent=1 // pred_check_branch
      %20 = sbr.rel (0) target = $region21
    $region20: #{tpu_custom_call.1} parent=1 // pred_region
      _
    $region21: #{tpu_custom_call.1} parent=1 // pred_fallthru
      _
    %v21 = vld [vmem:[%s0] sm:$0x3]
    %v22 = vld [vmem:[%s1] sm:$0xff]
    %v23 = vld [vmem:[%s1 + $0x8] sm:$0xff]
    %v24 = vld [vmem:[%s1 + $0x10] sm:$0xff]
    %v25 = vld [vmem:[%s1 + $0x18] sm:$0xff]
    %v26 = vld [vmem:[%s1 + $0x20] sm:$0xff]
    %v27 = vld [vmem:[%s1 + $0x28] sm:$0xff]
    %v28 = vld [vmem:[%s1 + $0x30] sm:$0xff]
    %v29 = vld [vmem:[%s1 + $0x38] sm:$0xff]
    %v30 = vld [vmem:[%s1 + $0x40] sm:$0xff]
    %v31 = vld [vmem:[%s1 + $0x48] sm:$0xff]
    %v32 = vld [vmem:[%s1 + $0x50] sm:$0xff]
    %v33 = vld [vmem:[%s1 + $0x58] sm:$0xff]
    %v34 = vld [vmem:[%s1 + $0x60] sm:$0xff]
    %v35 = vld [vmem:[%s1 + $0x68] sm:$0xff]
    %v36 = vld [vmem:[%s1 + $0x70] sm:$0xff]
    %v37 = vld [vmem:[%s1 + $0x78] sm:$0xff]
    %v38 = vld [vmem:[%s2] sm:$0xff]
    %v39 = vld [vmem:[%s2 + $0x8] sm:$0xff]
    %v40 = vld [vmem:[%s2 + $0x10] sm:$0xff]
    %v41 = vld [vmem:[%s2 + $0x18] sm:$0xff]
    %v42 = vld [vmem:[%s2 + $0x20] sm:$0xff]
    %v43 = vld [vmem:[%s2 + $0x28] sm:$0xff]
    %v44 = vld [vmem:[%s2 + $0x30] sm:$0xff]
    %v45 = vld [vmem:[%s2 + $0x38] sm:$0xff]
    %v46 = vld [vmem:[%s2 + $0x40] sm:$0xff]
    %v47 = vld [vmem:[%s2 + $0x48] sm:$0xff]
    %v48 = vld [vmem:[%s2 + $0x50] sm:$0xff]
    %v49 = vld [vmem:[%s2 + $0x58] sm:$0xff]
    %v50 = vld [vmem:[%s2 + $0x60] sm:$0xff]
    %v51 = vld [vmem:[%s2 + $0x68] sm:$0xff]
    %v52 = vld [vmem:[%s2 + $0x70] sm:$0xff]
    %v53 = vld [vmem:[%s2 + $0x78] sm:$0xff]
    %55 = vset.pattern.permute.xlu0 0
    %56 = vperm.xlu0 %55, %v38
    %v57 = vpop.permute.xlu0 %56
    %60 = vset.pattern.permute.xlu0 0
    %61 = vperm.xlu0 %60, %v39
    %v62 = vpop.permute.xlu0 %61
    %65 = vset.pattern.permute.xlu0 0
    %66 = vperm.xlu0 %65, %v40
    %v67 = vpop.permute.xlu0 %66
    %70 = vset.pattern.permute.xlu0 0
    %71 = vperm.xlu0 %70, %v41
    %v72 = vpop.permute.xlu0 %71
    %75 = vset.pattern.permute.xlu0 0
    %76 = vperm.xlu0 %75, %v42
    %v77 = vpop.permute.xlu0 %76
    %80 = vset.pattern.permute.xlu0 0
    %81 = vperm.xlu0 %80, %v43
    %v82 = vpop.permute.xlu0 %81
    %85 = vset.pattern.permute.xlu0 0
    %86 = vperm.xlu0 %85, %v44
    %v87 = vpop.permute.xlu0 %86
    %90 = vset.pattern.permute.xlu0 0
    %91 = vperm.xlu0 %90, %v45
    %v92 = vpop.permute.xlu0 %91
    %95 = vset.pattern.permute.xlu0 0
    %96 = vperm.xlu0 %95, %v46
    %v97 = vpop.permute.xlu0 %96
    %100 = vset.pattern.permute.xlu0 0
    %101 = vperm.xlu0 %100, %v47
    %v102 = vpop.permute.xlu0 %101
    %105 = vset.pattern.permute.xlu0 0
    %106 = vperm.xlu0 %105, %v48
    %v107 = vpop.permute.xlu0 %106
    %110 = vset.pattern.permute.xlu0 0
    %111 = vperm.xlu0 %110, %v49
    %v112 = vpop.permute.xlu0 %111
    %115 = vset.pattern.permute.xlu0 0
    %116 = vperm.xlu0 %115, %v50
    %v117 = vpop.permute.xlu0 %116
    %120 = vset.pattern.permute.xlu0 0
    %121 = vperm.xlu0 %120, %v51
    %v122 = vpop.permute.xlu0 %121
    %125 = vset.pattern.permute.xlu0 0
    %126 = vperm.xlu0 %125, %v52
    %v127 = vpop.permute.xlu0 %126
    %130 = vset.pattern.permute.xlu0 0
    %131 = vperm.xlu0 %130, %v53
    %v132 = vpop.permute.xlu0 %131
    %135 = vset.pattern.permute.xlu0 0
    %136 = vperm.xlu0 %135, %v22
    %v137 = vpop.permute.xlu0 %136
    %140 = vset.pattern.permute.xlu0 0
    %141 = vperm.xlu0 %140, %v23
    %v142 = vpop.permute.xlu0 %141
    %145 = vset.pattern.permute.xlu0 0
    %146 = vperm.xlu0 %145, %v24
    %v147 = vpop.permute.xlu0 %146
    %150 = vset.pattern.permute.xlu0 0
    %151 = vperm.xlu0 %150, %v25
    %v152 = vpop.permute.xlu0 %151
    %155 = vset.pattern.permute.xlu0 0
    %156 = vperm.xlu0 %155, %v26
    %v157 = vpop.permute.xlu0 %156
    %160 = vset.pattern.permute.xlu0 0
    %161 = vperm.xlu0 %160, %v27
    %v162 = vpop.permute.xlu0 %161
    %165 = vset.pattern.permute.xlu0 0
    %166 = vperm.xlu0 %165, %v28
    %v167 = vpop.permute.xlu0 %166
    %170 = vset.pattern.permute.xlu0 0
    %171 = vperm.xlu0 %170, %v29
    %v172 = vpop.permute.xlu0 %171
    %175 = vset.pattern.permute.xlu0 0
    %176 = vperm.xlu0 %175, %v30
    %v177 = vpop.permute.xlu0 %176
    %180 = vset.pattern.permute.xlu0 0
    %181 = vperm.xlu0 %180, %v31
    %v182 = vpop.permute.xlu0 %181
    %185 = vset.pattern.permute.xlu0 0
    %186 = vperm.xlu0 %185, %v32
    %v187 = vpop.permute.xlu0 %186
    %190 = vset.pattern.permute.xlu0 0
    %191 = vperm.xlu0 %190, %v33
    %v192 = vpop.permute.xlu0 %191
    %195 = vset.pattern.permute.xlu0 0
    %196 = vperm.xlu0 %195, %v34
    %v197 = vpop.permute.xlu0 %196
    %200 = vset.pattern.permute.xlu0 0
    %201 = vperm.xlu0 %200, %v35
    %v202 = vpop.permute.xlu0 %201
    %205 = vset.pattern.permute.xlu0 0
    %206 = vperm.xlu0 %205, %v36
    %v207 = vpop.permute.xlu0 %206
    %210 = vset.pattern.permute.xlu0 0
    %211 = vperm.xlu0 %210, %v37
    %v212 = vpop.permute.xlu0 %211
    %v214 = vperm.slane %v21, 0
    %v215 = vmul.f32 %v137, %v214
    %v216 = vmul.f32 %v142, %v214
    %v217 = vmul.f32 %v147, %v214
    %v218 = vmul.f32 %v152, %v214
    %v219 = vmul.f32 %v157, %v214
    %v220 = vmul.f32 %v162, %v214
    %v221 = vmul.f32 %v167, %v214
    %v222 = vmul.f32 %v172, %v214
    %v223 = vmul.f32 %v177, %v214
    %v224 = vmul.f32 %v182, %v214
    %v225 = vmul.f32 %v187, %v214
    %v226 = vmul.f32 %v192, %v214
    %v227 = vmul.f32 %v197, %v214
    %v228 = vmul.f32 %v202, %v214
    %v229 = vmul.f32 %v207, %v214
    %v230 = vmul.f32 %v212, %v214
    %v231 = vadd.f32 %v57, %v215
    %v232 = vadd.f32 %v62, %v216
    %v233 = vadd.f32 %v67, %v217
    %v234 = vadd.f32 %v72, %v218
    %v235 = vadd.f32 %v77, %v219
    %v236 = vadd.f32 %v82, %v220
    %v237 = vadd.f32 %v87, %v221
    %v238 = vadd.f32 %v92, %v222
    %v239 = vadd.f32 %v97, %v223
    %v240 = vadd.f32 %v102, %v224
    %v241 = vadd.f32 %v107, %v225
    %v242 = vadd.f32 %v112, %v226
    %v243 = vadd.f32 %v117, %v227
    %v244 = vadd.f32 %v122, %v228
    %v245 = vadd.f32 %v127, %v229
    %v246 = vadd.f32 %v132, %v230
    %247 = vset.pattern.permute.xlu0 1
    %248 = vperm.xlu0 %247, %v22
    %v249 = vpop.permute.xlu0 %248
    %251 = vset.pattern.permute.xlu0 1
    %252 = vperm.xlu0 %251, %v23
    %v253 = vpop.permute.xlu0 %252
    %255 = vset.pattern.permute.xlu0 1
    %256 = vperm.xlu0 %255, %v24
    %v257 = vpop.permute.xlu0 %256
    %259 = vset.pattern.permute.xlu0 1
    %260 = vperm.xlu0 %259, %v25
    %v261 = vpop.permute.xlu0 %260
    %263 = vset.pattern.permute.xlu0 1
    %264 = vperm.xlu0 %263, %v26
    %v265 = vpop.permute.xlu0 %264
    %267 = vset.pattern.permute.xlu0 1
    %268 = vperm.xlu0 %267, %v27
    %v269 = vpop.permute.xlu0 %268
    %271 = vset.pattern.permute.xlu0 1
    %272 = vperm.xlu0 %271, %v28
    %v273 = vpop.permute.xlu0 %272
    %275 = vset.pattern.permute.xlu0 1
    %276 = vperm.xlu0 %275, %v29
    %v277 = vpop.permute.xlu0 %276
    %279 = vset.pattern.permute.xlu0 1
    %280 = vperm.xlu0 %279, %v30
    %v281 = vpop.permute.xlu0 %280
    %283 = vset.pattern.permute.xlu0 1
    %284 = vperm.xlu0 %283, %v31
    %v285 = vpop.permute.xlu0 %284
    %287 = vset.pattern.permute.xlu0 1
    %288 = vperm.xlu0 %287, %v32
    %v289 = vpop.permute.xlu0 %288
    %291 = vset.pattern.permute.xlu0 1
    %292 = vperm.xlu0 %291, %v33
    %v293 = vpop.permute.xlu0 %292
    %295 = vset.pattern.permute.xlu0 1
    %296 = vperm.xlu0 %295, %v34
    %v297 = vpop.permute.xlu0 %296
    %299 = vset.pattern.permute.xlu0 1
    %300 = vperm.xlu0 %299, %v35
    %v301 = vpop.permute.xlu0 %300
    %303 = vset.pattern.permute.xlu0 1
    %304 = vperm.xlu0 %303, %v36
    %v305 = vpop.permute.xlu0 %304
    %307 = vset.pattern.permute.xlu0 1
    %308 = vperm.xlu0 %307, %v37
    %v309 = vpop.permute.xlu0 %308
    %v311 = vperm.slane %v21, 1
    %v312 = vmul.f32 %v249, %v311
    %v313 = vmul.f32 %v253, %v311
    %v314 = vmul.f32 %v257, %v311
    %v315 = vmul.f32 %v261, %v311
    %v316 = vmul.f32 %v265, %v311
    %v317 = vmul.f32 %v269, %v311
    %v318 = vmul.f32 %v273, %v311
    %v319 = vmul.f32 %v277, %v311
    %v320 = vmul.f32 %v281, %v311
    %v321 = vmul.f32 %v285, %v311
    %v322 = vmul.f32 %v289, %v311
    %v323 = vmul.f32 %v293, %v311
    %v324 = vmul.f32 %v297, %v311
    %v325 = vmul.f32 %v301, %v311
    %v326 = vmul.f32 %v305, %v311
    %v327 = vmul.f32 %v309, %v311
    %v328 = vadd.f32 %v231, %v312
    %v329 = vadd.f32 %v232, %v313
    %v330 = vadd.f32 %v233, %v314
    %v331 = vadd.f32 %v234, %v315
    %v332 = vadd.f32 %v235, %v316
    %v333 = vadd.f32 %v236, %v317
    %v334 = vadd.f32 %v237, %v318
    %v335 = vadd.f32 %v238, %v319
    %v336 = vadd.f32 %v239, %v320
    %v337 = vadd.f32 %v240, %v321
    %v338 = vadd.f32 %v241, %v322
    %v339 = vadd.f32 %v242, %v323
    %v340 = vadd.f32 %v243, %v324
    %v341 = vadd.f32 %v244, %v325
    %v342 = vadd.f32 %v245, %v326
    %v343 = vadd.f32 %v246, %v327
    %v344 = vmax.f32 %v328, 0.0
    %v345 = vmax.f32 %v329, 0.0
    %v346 = vmax.f32 %v330, 0.0
    %v347 = vmax.f32 %v331, 0.0
    %v348 = vmax.f32 %v332, 0.0
    %v349 = vmax.f32 %v333, 0.0
    %v350 = vmax.f32 %v334, 0.0
    %v351 = vmax.f32 %v335, 0.0
    %v352 = vmax.f32 %v336, 0.0
    %v353 = vmax.f32 %v337, 0.0
    %v354 = vmax.f32 %v338, 0.0
    %v355 = vmax.f32 %v339, 0.0
    %v356 = vmax.f32 %v340, 0.0
    %v357 = vmax.f32 %v341, 0.0
    %v358 = vmax.f32 %v342, 0.0
    %v359 = vmax.f32 %v343, 0.0
    %v360 = vld [vmem:[%s3] sm:$0xff]
    %v361 = vld [vmem:[%s4] sm:$0xff]
    %363 = vset.pattern.permute.xlu0 0
    %364 = vperm.xlu0 %363, %v361
    %v365 = vpop.permute.xlu0 %364
    %367 = vmatpush.msra.mxu0 %v359
    %368 = vmatpush.msra.mxu0 %v358
    %369 = vmatpush.msra.mxu0 %v357
    %370 = vmatpush.msra.mxu0 %v356
    %371 = vmatpush.msra.mxu0 %v355
    %372 = vmatpush.msra.mxu0 %v354
    %373 = vmatpush.msra.mxu0 %v353
    %374 = vmatpush.msra.mxu0 %v352
    %375 = vmatpush.msra.mxu0 %v351
    %376 = vmatpush.msra.mxu0 %v350
    %377 = vmatpush.msra.mxu0 %v349
    %378 = vmatpush.msra.mxu0 %v348
    %379 = vmatpush.msra.mxu0 %v347
    %380 = vmatpush.msra.mxu0 %v346
    %381 = vmatpush.msra.mxu0 %v345
    %382 = vmatpush.msra.mxu0 %v344
    %383 = vmatmul.f32.gmra.mxu0 %v360
    %v384 = vpop.f32.mrf.mxu0
    %v385 = vadd.f32 %v365, %v384
    %386 = vdwg.mxu0
    %387 = vst [vmem:[#allocation2] sm:$0xff] %v385
    // Predicated region
    $region22: #{tpu_custom_call.1} parent=1 // pred_check
      _
    $region23: #{tpu_custom_call.1} parent=1 // pred_check_branch
      %389 = sbr.rel (0) target = $region25
    $region24: #{tpu_custom_call.1} parent=1 // pred_region
      %391 = vsyncadd [#allocation3], 0
      %s393 = sshll.u32 [#allocation2], 4
      %s394 = int_to_ptr.vmem [resolvable:$true] %s393
      %s395 = sshll.u32 %s5, 4
      %s396 = int_to_ptr.hbm [resolvable:$true] %s395
      %398 = dma.vmem_to_hbm [thread:$0]  %s394, 128, %s396, [#allocation3]
    $region25: #{tpu_custom_call.1} parent=1 // pred_fallthru
      _
    // Predicated region
    $region26: #{tpu_custom_call.1} parent=1 // pred_check
      _
    $region27: #{tpu_custom_call.1} parent=1 // pred_check_branch
      %400 = sbr.rel (0) target = $region29
    $region28: #{tpu_custom_call.1} parent=1 // pred_region
      %402 = dma.done [#allocation3], 128
    $region29: #{tpu_custom_call.1} parent=1 // pred_fallthru
      _
    %403 = vsyncpa [#allocation3], 1

</llo_original>
